<compile_context>
chip_gen: v6e
topology: v6e:2x2x1
jax: 0.10.0
libtpu: 0.0.40
codegen_flags: <defaults>
</compile_context>

<pallas_src>
import functools
import math

import jax
import jax.numpy as jnp
from jax.experimental import pallas as pl
from jax.experimental.pallas import tpu as pltpu


def _round_up(x, m):
    return (x + m - 1) // m * m


def _select_tkh(Hp, tkh):
    """Largest multiple of 128 that divides Hp and is <= min(tkh, Hp)."""
    best = 128
    k = 128
    while k <= min(tkh, Hp):
        if Hp % k == 0:
            best = k
        k += 128
    return best


def _tpu_generation_defaults():
    """Pick tile sizes / VMEM cap per TPU generation (best-effort detection)."""
    kind = ""
    try:
        kind = jax.devices()[0].device_kind.lower()
    except Exception:  # pragma: no cover - CPU/interpret fallback
        pass
    if "v7" in kind or "7x" in kind:
        # 64 MiB VMEM per TC, 2 TCs per chip, ridge ~310 FLOP/B.
        return dict(tm=384, tkh=256, num_tensorcores=2,
                    vmem_limit_bytes=44 * 1024 * 1024)
    if "v5" in kind:
        # v5e ridge ~240 FLOP/B: bf16 tm=256 is already at the knee.
        return dict(tm=256, tkh=256, num_tensorcores=1,
                    vmem_limit_bytes=64 * 1024 * 1024)
    # v6e (and default): ridge ~650-700 FLOP/B -> large tm.
    return dict(tm=512, tkh=256, num_tensorcores=1,
                vmem_limit_bytes=64 * 1024 * 1024)


# ---------------------------------------------------------------------------
# Kernel
# ---------------------------------------------------------------------------
def swiglu_kernel(x_ref, w13_ref, w2_ref, o_ref, acc_ref):
    # Grid: (M tiles, H tiles).  H axis is the reduction for the W2 matmul.
    h = pl.program_id(1)

    @pl.when(h == 0)
    def _():
        acc_ref[...] = jnp.zeros_like(acc_ref)

    tkh = w2_ref.shape[0]
    # One MXU push for both branches: x @ [W1_h | W3_h]  -> (tm, 2*tkh) f32.
    hh = jnp.dot(x_ref[...], w13_ref[...], preferred_element_type=jnp.float32)
    h1 = hh[:, :tkh]
    h3 = hh[:, tkh:]
    # SiLU(h1) * h3 in f32 (VPU/EUP); exact for zero-padded hidden columns.
    gated = (h1 * jax.nn.sigmoid(h1)) * h3
    acc_ref[...] += jnp.dot(gated.astype(w2_ref.dtype), w2_ref[...],
                            preferred_element_type=jnp.float32)

    # Output block index is constant along the H axis (tile stays VMEM
    # resident); cast + store only once, on the last reduction step.
    @pl.when(h == pl.num_programs(1) - 1)
    def _():
        o_ref[...] = acc_ref[...].astype(o_ref.dtype)


# ---------------------------------------------------------------------------
# Weight preparation (do ONCE per weight set, outside the hot path)
# ---------------------------------------------------------------------------
def prepare_swiglu_weights(w1_t, w3_t, w2_t, *, tkh=256,
                           compute_dtype=jnp.bfloat16):
    """w1_t/w3_t: (D, H); w2_t: (H, D).  Returns (w13_p, w2_p, dims).

    w13_p interleaves W1/W3 column tiles of width tkh_eff so one BlockSpec
    (and one MXU push) feeds both gate branches.  Zero-padding of D/H is
    mathematically exact for SwiGLU (silu(0)*0 == 0).
    """
    D, H = w1_t.shape
    cdt = jnp.dtype(compute_dtype)
    Dp = _round_up(D, 128)
    Hp = _round_up(H, 128)
    tkh_eff = _select_tkh(Hp, tkh)
    n_h = Hp // tkh_eff

    w1_p = jnp.zeros((Dp, Hp), cdt).at[:D, :H].set(w1_t.astype(cdt))
    w3_p = jnp.zeros((Dp, Hp), cdt).at[:D, :H].set(w3_t.astype(cdt))
    # Block h of w13_p is [W1[:, h*tkh:(h+1)*tkh] | W3[:, h*tkh:(h+1)*tkh]].
    w13_p = jnp.concatenate(
        [w1_p.reshape(Dp, n_h, tkh_eff), w3_p.reshape(Dp, n_h, tkh_eff)],
        axis=-1,
    ).reshape(Dp, 2 * Hp)
    w2_p = jnp.zeros((Hp, Dp), cdt).at[:H, :D].set(w2_t.astype(cdt))

    dims = (int(D), int(H), int(Dp), int(Hp), int(tkh_eff))
    return w13_p, w2_p, dims


# ---------------------------------------------------------------------------
# Jitted entry point (weights already padded/interleaved)
# ---------------------------------------------------------------------------
@functools.partial(
    jax.jit,
    static_argnames=("dims", "tm", "num_tensorcores", "vmem_limit_bytes"),
)
def swiglu_padded(x, w13_p, w2_p, *, dims, tm=512, num_tensorcores=1,
                  vmem_limit_bytes=64 * 1024 * 1024):
    """x: (..., D).  Returns (..., D) in x.dtype."""
    D, H, Dp, Hp, tkh_eff = dims
    cdt = jnp.dtype(w13_p.dtype)
    out_dtype = x.dtype
    orig_shape = x.shape

    x2d = x.reshape(-1, D).astype(cdt)
    M = x2d.shape[0]

    # Sublane granularity: 8 rows (f32) / 16 (bf16) / 32 (int8).
    gran = 32 // cdt.itemsize
    Mr = _round_up(M, gran)
    tm_eff = min(_round_up(tm, gran), Mr)

    # v7x: keep >= num_tensorcores M tiles (when M permits) so the "parallel"
    # M axis shards across both TensorCores.
    if num_tensorcores > 1 and Mr >= num_tensorcores * gran:
        tm_eff = min(tm_eff, _round_up(pl.cdiv(Mr, num_tensorcores), gran))

    # Keep the (double-buffered) tile footprint within the VMEM cap.
    def _footprint(tm_):
        b = 2 * (tm_ * Dp + Dp * 2 * tkh_eff + tkh_eff * Dp) * cdt.itemsize
        b += 2 * tm_ * Dp * jnp.dtype(out_dtype).itemsize      # out buffers
        b += tm_ * Dp * 4                                       # f32 accumulator
        b += 4 * tm_ * 2 * tkh_eff * 4                          # f32 temporaries
        return b

    while tm_eff > gran and _footprint(tm_eff) > int(vmem_limit_bytes * 0.85):
        tm_eff = max(gran, _round_up(tm_eff // 2, gran))

    Mp = _round_up(M, tm_eff)
    n_m = Mp // tm_eff
    n_h = Hp // tkh_eff

    # Zero-pad tokens (exact: padded rows contribute nothing, sliced off below).
    x_p = jnp.zeros((Mp, Dp), cdt).at[:M, :D].set(x2d)

    # HBM traffic: x read once, weights re-streamed per M tile, output written.
    w_bytes = (2 * Dp * Hp + Hp * Dp) * cdt.itemsize
    cost = pl.CostEstimate(
        flops=6 * M * D * H,
        transcendentals=M * H,
        bytes_accessed=(cdt.itemsize * 2 * M * D
                        + w_bytes * n_m
                        + jnp.dtype(out_dtype).itemsize * M * D),
    )

    out = pl.pallas_call(
        swiglu_kernel,
        out_shape=jax.ShapeDtypeStruct((Mp, Dp), out_dtype),
        grid=(n_m, n_h),
        in_specs=[
            pl.BlockSpec((tm_eff, Dp), lambda i, h: (i, 0)),        # x tile
            pl.BlockSpec((Dp, 2 * tkh_eff), lambda i, h: (0, h)),   # [W1|W3] tile
            pl.BlockSpec((tkh_eff, Dp), lambda i, h: (h, 0)),       # W2 row tile
        ],
        out_specs=pl.BlockSpec((tm_eff, Dp), lambda i, h: (i, 0)),
        scratch_shapes=[pltpu.VMEM((tm_eff, Dp), jnp.float32)],
        compiler_params=pltpu.CompilerParams(
            dimension_semantics=("parallel", "arbitrary"),
            vmem_limit_bytes=int(vmem_limit_bytes),
        ),
        cost_estimate=cost,
        # TODO(synk): if profiling shows exposed weight-DMA bubbles once
        # compute-bound, try pipeline_mode=pl.Buffered(3) on the weight specs.
    )(x_p, w13_p, w2_p)

    return out[:M, :D].reshape(orig_shape)


# ---------------------------------------------------------------------------
# Convenience wrapper (prepares weights per call; prefer prepare-once + padded
# entry point for repeated calls with fixed weights).
# ---------------------------------------------------------------------------
def swiglu(x, w1_t, w3_t, w2_t, *, tm=None, tkh=None,
           compute_dtype=jnp.bfloat16, num_tensorcores=None,
           vmem_limit_bytes=None):
    d = _tpu_generation_defaults()
    tm = d["tm"] if tm is None else tm
    tkh = d["tkh"] if tkh is None else tkh
    num_tensorcores = (d["num_tensorcores"] if num_tensorcores is None
                       else num_tensorcores)
    vmem_limit_bytes = (d["vmem_limit_bytes"] if vmem_limit_bytes is None
                        else vmem_limit_bytes)
    w13_p, w2_p, dims = prepare_swiglu_weights(
        w1_t, w3_t, w2_t, tkh=tkh, compute_dtype=compute_dtype)
    return swiglu_padded(x, w13_p, w2_p, dims=dims, tm=tm,
                         num_tensorcores=num_tensorcores,
                         vmem_limit_bytes=vmem_limit_bytes)


def swiglu_ref(x, w1_t, w3_t, w2_t):
    h1 = x @ w1_t
    h3 = x @ w3_t
    return (h1 * jax.nn.sigmoid(h1) * h3) @ w2_t


if __name__ == "__main__":
    # Shapes consistent with the module: dim=32, default hidden = int(8*32/3) = 85.
    batch, seq, dim = 2, 8, 32
    hidden = int(8 * dim / 3)  # 85

    key = jax.random.PRNGKey(0)
    kx, k1, k2, k3 = jax.random.split(key, 4)

    x = jax.random.normal(kx, (batch, seq, dim), dtype=jnp.float32)
    # nn.Linear-style weights (out, in), transposed to (in, out) for x @ W.
    bound1 = 1.0 / math.sqrt(dim)
    bound2 = 1.0 / math.sqrt(hidden)
    w1 = jax.random.uniform(k1, (hidden, dim), jnp.float32, -bound1, bound1)
    w3 = jax.random.uniform(k3, (hidden, dim), jnp.float32, -bound1, bound1)
    w2 = jax.random.uniform(k2, (dim, hidden), jnp.float32, -bound2, bound2)
    w1_t, w3_t, w2_t = w1.T, w3.T, w2.T

    defaults = _tpu_generation_defaults()
    y_ref = swiglu_ref(x, w1_t, w3_t, w2_t)

    # 1) f32 MXU inputs: strict numerical check of the kernel structure.
    w13_f32, w2p_f32, dims_f32 = prepare_swiglu_weights(
        w1_t, w3_t, w2_t, tkh=defaults["tkh"], compute_dtype=jnp.float32)
    y32 = swiglu_padded(x, w13_f32, w2p_f32, dims=dims_f32,
                        tm=defaults["tm"],
                        num_tensorcores=defaults["num_tensorcores"],
                        vmem_limit_bytes=defaults["vmem_limit_bytes"])
    jax.block_until_ready(y32)
    assert y32.shape == (batch, seq, dim)
    assert jnp.allclose(y32, y_ref, atol=1e-4, rtol=1e-4), "f32 mismatch vs reference"

    # 2) Default bf16 MXU-input path (f32 accumulation): loose tolerance.
    y16 = swiglu(x, w1_t, w3_t, w2_t)
    jax.block_until_ready(y16)
    assert y16.shape == (batch, seq, dim)
    assert jnp.allclose(y16, y_ref, atol=5e-2, rtol=5e-2), "bf16 mismatch vs reference"

    print("KERNEL_OK")
</pallas_src>

<mosaic_0001>
module attributes {stable_mosaic.version = 11 : i64} {
  func.func @swiglu_kernel(%arg0: i32, %arg1: i32, %arg2: memref<16x128xf32, #tpu.memory_space<vmem>>, %arg3: memref<128x256xf32, #tpu.memory_space<vmem>>, %arg4: memref<128x128xf32, #tpu.memory_space<vmem>>, %arg5: memref<16x128xf32, #tpu.memory_space<vmem>>, %arg6: memref<16x128xf32, #tpu.memory_space<vmem>>) attributes {dimension_semantics = [#tpu.dimension_semantics<parallel>, #tpu.dimension_semantics<arbitrary>], iteration_bounds = array<i64: 1, 1>, scalar_prefetch = 0 : i64, scratch_operands = 1 : i64, tpu.core_type = #tpu.core_type<tc>, window_params = [{transform_indices = @transform_0, window_bounds = array<i64: 16, 128>}, {transform_indices = @transform_1, window_bounds = array<i64: 128, 256>}, {transform_indices = @transform_2, window_bounds = array<i64: 128, 128>}, {transform_indices = @transform_3, window_bounds = array<i64: 16, 128>}]} {
    %c0_i32 = arith.constant 0 : i32
    %0 = arith.cmpi eq, %arg1, %c0_i32 : i32
    %1 = arith.extui %0 : i1 to i32
    %c0_i32_0 = arith.constant 0 : i32
    %2 = arith.cmpi ne, %1, %c0_i32_0 : i32
    scf.if %2 {
      %cst_14 = arith.constant 0.000000e+00 : f32
      %23 = vector.broadcast %cst_14 : f32 to vector<16x128xf32>
      %c0_15 = arith.constant 0 : index
      %c0_16 = arith.constant 0 : index
      %24 = vector.load %arg6[%c0_15, %c0_16] : memref<16x128xf32, #tpu.memory_space<vmem>>, vector<16x128xf32>
      tpu.vector_store %arg6[%c0_15, %c0_16], %23 {strides = array<i32>} : memref<16x128xf32, #tpu.memory_space<vmem>>, vector<16x128xf32>,
    } else {
    }
    %c0 = arith.constant 0 : index
    %c0_1 = arith.constant 0 : index
    %3 = vector.load %arg2[%c0, %c0_1] : memref<16x128xf32, #tpu.memory_space<vmem>>, vector<16x128xf32>
    %c0_2 = arith.constant 0 : index
    %c0_3 = arith.constant 0 : index
    %4 = vector.load %arg3[%c0_2, %c0_3] : memref<128x256xf32, #tpu.memory_space<vmem>>, vector<128x256xf32>
    %cst = arith.constant dense<0.000000e+00> : vector<16x256xf32>
    %5 = tpu.matmul %3, %4, %cst {dimension_numbers = #tpu.dot_dimension_numbers<[1], [0], [0], [1], [0, 0, 1, 1], [], []>} : vector<16x128xf32>, vector<128x256xf32>, vector<16x256xf32> -> vector<16x256xf32>
    %6 = vector.extract_strided_slice %5 {offsets = [0, 0], sizes = [16, 128], strides = [1, 1]} : vector<16x256xf32> to vector<16x128xf32>
    %7 = vector.extract_strided_slice %5 {offsets = [0, 128], sizes = [16, 128], strides = [1, 1]} : vector<16x256xf32> to vector<16x128xf32>
    %8 = arith.negf %6 : vector<16x128xf32>
    %9 = math.exp %8 : vector<16x128xf32>
    %cst_4 = arith.constant 1.000000e+00 : f32
    %10 = vector.broadcast %cst_4 : f32 to vector<16x128xf32>
    %11 = arith.addf %10, %9 : vector<16x128xf32>
    %12 = arith.divf %10, %11 : vector<16x128xf32>
    %13 = arith.mulf %6, %12 : vector<16x128xf32>
    %14 = arith.mulf %13, %7 : vector<16x128xf32>
    %c0_5 = arith.constant 0 : index
    %c0_6 = arith.constant 0 : index
    %15 = vector.load %arg6[%c0_5, %c0_6] : memref<16x128xf32, #tpu.memory_space<vmem>>, vector<16x128xf32>
    %c0_7 = arith.constant 0 : index
    %c0_8 = arith.constant 0 : index
    %16 = vector.load %arg4[%c0_7, %c0_8] : memref<128x128xf32, #tpu.memory_space<vmem>>, vector<128x128xf32>
    %cst_9 = arith.constant dense<0.000000e+00> : vector<16x128xf32>
    %17 = tpu.matmul %14, %16, %cst_9 {dimension_numbers = #tpu.dot_dimension_numbers<[1], [0], [0], [1], [0, 0, 1, 1], [], []>} : vector<16x128xf32>, vector<128x128xf32>, vector<16x128xf32> -> vector<16x128xf32>
    %18 = arith.addf %15, %17 : vector<16x128xf32>
    %c0_10 = arith.constant 0 : index
    %c0_11 = arith.constant 0 : index
    %19 = vector.load %arg6[%c0_10, %c0_11] : memref<16x128xf32, #tpu.memory_space<vmem>>, vector<16x128xf32>
    tpu.vector_store %arg6[%c0_10, %c0_11], %18 {strides = array<i32>} : memref<16x128xf32, #tpu.memory_space<vmem>>, vector<16x128xf32>,
    %c0_i32_12 = arith.constant 0 : i32
    %20 = arith.cmpi eq, %arg1, %c0_i32_12 : i32
    %21 = arith.extui %20 : i1 to i32
    %c0_i32_13 = arith.constant 0 : i32
    %22 = arith.cmpi ne, %21, %c0_i32_13 : i32
    scf.if %22 {
      %c0_14 = arith.constant 0 : index
      %c0_15 = arith.constant 0 : index
      %23 = vector.load %arg6[%c0_14, %c0_15] : memref<16x128xf32, #tpu.memory_space<vmem>>, vector<16x128xf32>
      %c0_16 = arith.constant 0 : index
      %c0_17 = arith.constant 0 : index
      %24 = vector.load %arg5[%c0_16, %c0_17] : memref<16x128xf32, #tpu.memory_space<vmem>>, vector<16x128xf32>
      tpu.vector_store %arg5[%c0_16, %c0_17], %23 {strides = array<i32>} : memref<16x128xf32, #tpu.memory_space<vmem>>, vector<16x128xf32>,
    } else {
    }
    return
  }
  func.func @transform_0(%arg0: i32, %arg1: i32) -> (i32, i32) {
    %c0_i32 = arith.constant 0 : i32
    %c0_i32_0 = arith.constant 0 : i32
    return %arg0, %c0_i32 : i32, i32
  }
  func.func @transform_1(%arg0: i32, %arg1: i32) -> (i32, i32) {
    %c0_i32 = arith.constant 0 : i32
    %c0_i32_0 = arith.constant 0 : i32
    return %c0_i32, %arg1 : i32, i32
  }
  func.func @transform_2(%arg0: i32, %arg1: i32) -> (i32, i32) {
    %c0_i32 = arith.constant 0 : i32
    %c0_i32_0 = arith.constant 0 : i32
    return %arg1, %c0_i32 : i32, i32
  }
  func.func @transform_3(%arg0: i32, %arg1: i32) -> (i32, i32) {
    %c0_i32 = arith.constant 0 : i32
    %c0_i32_0 = arith.constant 0 : i32
    return %arg0, %c0_i32 : i32, i32
  }
}

</mosaic_0001>

<llo_original>
// kernel: swiglu_padded.1
$region0: #{swiglu_padded.1}
  #allocation0 [shape = 'u32[]', space=smem, size = 0x4, offset = 0x4, fixed_abs, tag = 'smem constant byte address 0x4 - core index']
  #allocation1 [shape = 'u32[144,128]{1,0:T(1,128)}', space=vmem, size = 0x12000, scoped, tag = 'internal scratch']
  #allocation2 [shape = 'f32[16,128]{1,0:T(8,128)}', space=vmem, size = 0x2000, scoped, tag = 'scratch operand']
  %s0 = inlined_call_operand.vmem [shape: f32[16,128], index: 0, kind: input, shape index: {}]
  %s1 = inlined_call_operand.hbm [shape: f32[128,256], index: 1, kind: input, shape index: {}]
  %s2 = inlined_call_operand.hbm [shape: f32[128,128], index: 2, kind: input, shape index: {}]
  %s3 = inlined_call_operand.vmem [shape: f32[16,128], index: 3, kind: output, shape index: {}]
  %s4 = sld [smem:[#allocation0]]
  $region38: #{swiglu_padded.1} parent=0
    _
  %s6 = ssub.s32 1, %s4
  %s7 = scalar_select 0, %s6, %s4
  $region1: #{swiglu_padded.1} parent=0
    #allocation3 [shape = 'u8[131072]{0}', space=vmem, size = 0x20000, scoped, tag = 'input window, operand 1, single buffered']
    #allocation4 [shape = 's32[1]{0}', space=sflag, size = 0x4, scoped, tag = 'scoped memory for swiglu_padded.1']
    #allocation5 [shape = 'u8[65536]{0}', space=vmem, size = 0x10000, scoped, tag = 'input window, operand 2, single buffered']
    #allocation6 [shape = 's32[1]{0}', space=sflag, size = 0x4, scoped, tag = 'scoped memory for swiglu_padded.1']
    %8 = vsyncpa [#allocation4], 0
    %9 = vsyncpa [#allocation6], 0
    // Predicated region
    $region2: #{swiglu_padded.1} parent=1 // pred_check
      _
    $region3: #{swiglu_padded.1} parent=1 // pred_check_branch
      %11 = sbr.rel (0) target = $region5
    $region4: #{swiglu_padded.1} parent=1 // pred_region
      _
    $region5: #{swiglu_padded.1} parent=1 // pred_fallthru
      _
    // Predicated region
    $region6: #{swiglu_padded.1} parent=1 // pred_check
      _
    $region7: #{swiglu_padded.1} parent=1 // pred_check_branch
      %13 = sbr.rel (0) target = $region9
    $region8: #{swiglu_padded.1} parent=1 // pred_region
      %s15 = ssub.s32 4096, 4096
      %16 = vsyncadd [#allocation4], %s15
      %s17 = sshll.u32 [#allocation3], 4
      %s18 = int_to_ptr.vmem [resolvable:$true] %s17
      %23 = dma.hbm_to_vmem [thread:$0]  %s1, 4096, %s18, [#allocation4], 256, 256, 16
    $region9: #{swiglu_padded.1} parent=1 // pred_fallthru
      _
    // Predicated region
    $region10: #{swiglu_padded.1} parent=1 // pred_check
      _
    $region11: #{swiglu_padded.1} parent=1 // pred_check_branch
      %25 = sbr.rel (0) target = $region13
    $region12: #{swiglu_padded.1} parent=1 // pred_region
      %s27 = ssub.s32 2048, 2048
      %28 = vsyncadd [#allocation6], %s27
      %s29 = sshll.u32 [#allocation5], 4
      %s30 = int_to_ptr.vmem [resolvable:$true] %s29
      %35 = dma.hbm_to_vmem [thread:$0]  %s2, 2048, %s30, [#allocation6], 128, 128, 8
    $region13: #{swiglu_padded.1} parent=1 // pred_fallthru
      _
    // Predicated region
    $region14: #{swiglu_padded.1} parent=1 // pred_check
      _
    $region15: #{swiglu_padded.1} parent=1 // pred_check_branch
      %37 = sbr.rel (0) target = $region17
    $region16: #{swiglu_padded.1} parent=1 // pred_region
      %38 = dma.done [#allocation4], 4096
    $region17: #{swiglu_padded.1} parent=1 // pred_fallthru
      _
    // Predicated region
    $region18: #{swiglu_padded.1} parent=1 // pred_check
      _
    $region19: #{swiglu_padded.1} parent=1 // pred_check_branch
      %40 = sbr.rel (0) target = $region21
    $region20: #{swiglu_padded.1} parent=1 // pred_region
      %41 = dma.done [#allocation6], 2048
    $region21: #{swiglu_padded.1} parent=1 // pred_fallthru
      _
    %p42 = scmp.eq.s32.totalorder 0, 0
    // Predicated region
    $region22: #{swiglu_padded.1} parent=1 // pred_check
      %p43 = pneg %p42
    $region23: #{swiglu_padded.1} parent=1 // pred_check_branch
      %45 = sbr.rel (%p43) target = $region25
    $region24: #{swiglu_padded.1} parent=1 // pred_region
      %46 = vst [vmem:[#allocation2] sm:$0xff] 0.0
      %47 = vst [vmem:[#allocation2 + $0x8] sm:$0xff] 0.0
    $region25: #{swiglu_padded.1} parent=1 // pred_fallthru
      _
    %v48 = vld [vmem:[%s0] sm:$0xff]
    %v49 = vld [vmem:[%s0 + $0x8] sm:$0xff]
    %v50 = vld [vmem:[#allocation3] sm:$0xff]
    %v51 = vld [vmem:[#allocation3 + $0x8] sm:$0xff]
    %v52 = vld [vmem:[#allocation3 + $0x10] sm:$0xff]
    %v53 = vld [vmem:[#allocation3 + $0x18] sm:$0xff]
    %v54 = vld [vmem:[#allocation3 + $0x20] sm:$0xff]
    %v55 = vld [vmem:[#allocation3 + $0x28] sm:$0xff]
    %v56 = vld [vmem:[#allocation3 + $0x30] sm:$0xff]
    %v57 = vld [vmem:[#allocation3 + $0x38] sm:$0xff]
    %v58 = vld [vmem:[#allocation3 + $0x40] sm:$0xff]
    %v59 = vld [vmem:[#allocation3 + $0x48] sm:$0xff]
    %v60 = vld [vmem:[#allocation3 + $0x50] sm:$0xff]
    %v61 = vld [vmem:[#allocation3 + $0x58] sm:$0xff]
    %v62 = vld [vmem:[#allocation3 + $0x60] sm:$0xff]
    %v63 = vld [vmem:[#allocation3 + $0x68] sm:$0xff]
    %v64 = vld [vmem:[#allocation3 + $0x70] sm:$0xff]
    %v65 = vld [vmem:[#allocation3 + $0x78] sm:$0xff]
    %v66 = vld [vmem:[#allocation3 + $0x80] sm:$0xff]
    %v67 = vld [vmem:[#allocation3 + $0x88] sm:$0xff]
    %v68 = vld [vmem:[#allocation3 + $0x90] sm:$0xff]
    %v69 = vld [vmem:[#allocation3 + $0x98] sm:$0xff]
    %v70 = vld [vmem:[#allocation3 + $0xa0] sm:$0xff]
    %v71 = vld [vmem:[#allocation3 + $0xa8] sm:$0xff]
    %v72 = vld [vmem:[#allocation3 + $0xb0] sm:$0xff]
    %v73 = vld [vmem:[#allocation3 + $0xb8] sm:$0xff]
    %v74 = vld [vmem:[#allocation3 + $0xc0] sm:$0xff]
    %v75 = vld [vmem:[#allocation3 + $0xc8] sm:$0xff]
    %v76 = vld [vmem:[#allocation3 + $0xd0] sm:$0xff]
    %v77 = vld [vmem:[#allocation3 + $0xd8] sm:$0xff]
    %v78 = vld [vmem:[#allocation3 + $0xe0] sm:$0xff]
    %v79 = vld [vmem:[#allocation3 + $0xe8] sm:$0xff]
    %v80 = vld [vmem:[#allocation3 + $0xf0] sm:$0xff]
    %v81 = vld [vmem:[#allocation3 + $0xf8] sm:$0xff]
    %82 = vmatprep.subr.mxu0 %v81
    %83 = vmatpush1.msra.mxu0 %v80
    %84 = vmatprep.subr.mxu0 %v79
    %85 = vmatpush1.msra.mxu0 %v78
    %86 = vmatprep.subr.mxu0 %v77
    %87 = vmatpush1.msra.mxu0 %v76
    %88 = vmatprep.subr.mxu0 %v75
    %89 = vmatpush1.msra.mxu0 %v74
    %90 = vmatprep.subr.mxu0 %v73
    %91 = vmatpush1.msra.mxu0 %v72
    %92 = vmatprep.subr.mxu0 %v71
    %93 = vmatpush1.msra.mxu0 %v70
    %94 = vmatprep.subr.mxu0 %v69
    %95 = vmatpush1.msra.mxu0 %v68
    %96 = vmatprep.subr.mxu0 %v67
    %97 = vmatpush1.msra.mxu0 %v66
    %98 = vmatprep.subr.mxu0 %v65
    %99 = vmatpush1.msra.mxu0 %v64
    %100 = vmatprep.subr.mxu0 %v63
    %101 = vmatpush1.msra.mxu0 %v62
    %102 = vmatprep.subr.mxu0 %v61
    %103 = vmatpush1.msra.mxu0 %v60
    %104 = vmatprep.subr.mxu0 %v59
    %105 = vmatpush1.msra.mxu0 %v58
    %106 = vmatprep.subr.mxu0 %v57
    %107 = vmatpush1.msra.mxu0 %v56
    %108 = vmatprep.subr.mxu0 %v55
    %109 = vmatpush1.msra.mxu0 %v54
    %110 = vmatprep.subr.mxu0 %v53
    %111 = vmatpush1.msra.mxu0 %v52
    %112 = vmatprep.subr.mxu0 %v51
    %113 = vmatpush1.msra.mxu0 %v50
    %114 = vmatprep.subr.mxu0 0.0
    %115 = vmatpush2.msra.mxu0 0.0
    %116 = vmatprep.subr.mxu0 0.0
    %117 = vmatpush2.msra.mxu0 0.0
    %118 = vmatprep.subr.mxu0 0.0
    %119 = vmatpush2.msra.mxu0 0.0
    %120 = vmatprep.subr.mxu0 0.0
    %121 = vmatpush2.msra.mxu0 0.0
    %122 = vmatprep.subr.mxu0 0.0
    %123 = vmatpush2.msra.mxu0 0.0
    %124 = vmatprep.subr.mxu0 0.0
    %125 = vmatpush2.msra.mxu0 0.0
    %126 = vmatprep.subr.mxu0 0.0
    %127 = vmatpush2.msra.mxu0 0.0
    %128 = vmatprep.subr.mxu0 0.0
    %129 = vmatpush2.msra.mxu0 0.0
    %130 = vmatprep.subr.mxu0 0.0
    %131 = vmatpush2.msra.mxu0 0.0
    %132 = vmatprep.subr.mxu0 0.0
    %133 = vmatpush2.msra.mxu0 0.0
    %134 = vmatprep.subr.mxu0 0.0
    %135 = vmatpush2.msra.mxu0 0.0
    %136 = vmatprep.subr.mxu0 0.0
    %137 = vmatpush2.msra.mxu0 0.0
    %138 = vmatprep.subr.mxu0 0.0
    %139 = vmatpush2.msra.mxu0 0.0
    %140 = vmatprep.subr.mxu0 0.0
    %141 = vmatpush2.msra.mxu0 0.0
    %142 = vmatprep.subr.mxu0 0.0
    %143 = vmatpush2.msra.mxu0 0.0
    %144 = vmatprep.subr.mxu0 0.0
    %145 = vmatpush2.msra.mxu0 0.0
    %146 = vmatprep.mubr.f32.mxu0 0.0
    %147 = vmatmul.mubr.f32.gmra.mxu0 %v48
    %v148 = vpop.f32.mrf.mxu0
    %v149 = vadd.f32 0.0, %v148
    %v150 = vpop.f32.mrf.mxu0
    %v151 = vadd.f32 0.0, %v150
    %152 = vmatprep.mubr.f32.mxu0 0.0
    %153 = vmatmul.mubr.f32.gmra.mxu0 %v49
    %v154 = vpop.f32.mrf.mxu0
    %v155 = vadd.f32 0.0, %v154
    %v156 = vpop.f32.mrf.mxu0
    %v157 = vadd.f32 0.0, %v156
    %158 = vdwg.mxu0
    %v159 = vxor.u32 %v149, 2147483648
    %v160 = vxor.u32 %v155, 2147483648
    %v161 = vmul.f32 %v159, 1.442695
    %v162 = vpow.pop %v161
    %v163 = vmul.f32 %v160, 1.442695
    %v164 = vpow.pop %v163
    %v165 = vadd.f32 %v162, 1.0
    %v166 = vadd.f32 %v164, 1.0
    %v167 = vrcp.pop %v165
    %v168 = vmul.f32 1.0, %v167
    %v169 = vrcp.pop %v166
    %v170 = vmul.f32 1.0, %v169
    %v171 = vmul.f32 %v149, %v168
    %v172 = vmul.f32 %v155, %v170
    %v173 = vmul.f32 %v171, %v151
    %v174 = vmul.f32 %v172, %v157
    %v175 = vld [vmem:[#allocation2] sm:$0xff]
    %v176 = vld [vmem:[#allocation2 + $0x8] sm:$0xff]
    %v177 = vld [vmem:[#allocation5] sm:$0xff]
    %v178 = vld [vmem:[#allocation5 + $0x8] sm:$0xff]
    %v179 = vld [vmem:[#allocation5 + $0x10] sm:$0xff]
    %v180 = vld [vmem:[#allocation5 + $0x18] sm:$0xff]
    %v181 = vld [vmem:[#allocation5 + $0x20] sm:$0xff]
    %v182 = vld [vmem:[#allocation5 + $0x28] sm:$0xff]
    %v183 = vld [vmem:[#allocation5 + $0x30] sm:$0xff]
    %v184 = vld [vmem:[#allocation5 + $0x38] sm:$0xff]
    %v185 = vld [vmem:[#allocation5 + $0x40] sm:$0xff]
    %v186 = vld [vmem:[#allocation5 + $0x48] sm:$0xff]
    %v187 = vld [vmem:[#allocation5 + $0x50] sm:$0xff]
    %v188 = vld [vmem:[#allocation5 + $0x58] sm:$0xff]
    %v189 = vld [vmem:[#allocation5 + $0x60] sm:$0xff]
    %v190 = vld [vmem:[#allocation5 + $0x68] sm:$0xff]
    %v191 = vld [vmem:[#allocation5 + $0x70] sm:$0xff]
    %v192 = vld [vmem:[#allocation5 + $0x78] sm:$0xff]
    %193 = vmatprep.subr.mxu0 0.0
    %194 = vmatpush1.msra.mxu0 %v192
    %195 = vmatprep.subr.mxu0 0.0
    %196 = vmatpush1.msra.mxu0 %v191
    %197 = vmatprep.subr.mxu0 0.0
    %198 = vmatpush1.msra.mxu0 %v190
    %199 = vmatprep.subr.mxu0 0.0
    %200 = vmatpush1.msra.mxu0 %v189
    %201 = vmatprep.subr.mxu0 0.0
    %202 = vmatpush1.msra.mxu0 %v188
    %203 = vmatprep.subr.mxu0 0.0
    %204 = vmatpush1.msra.mxu0 %v187
    %205 = vmatprep.subr.mxu0 0.0
    %206 = vmatpush1.msra.mxu0 %v186
    %207 = vmatprep.subr.mxu0 0.0
    %208 = vmatpush1.msra.mxu0 %v185
    %209 = vmatprep.subr.mxu0 0.0
    %210 = vmatpush1.msra.mxu0 %v184
    %211 = vmatprep.subr.mxu0 0.0
    %212 = vmatpush1.msra.mxu0 %v183
    %213 = vmatprep.subr.mxu0 0.0
    %214 = vmatpush1.msra.mxu0 %v182
    %215 = vmatprep.subr.mxu0 0.0
    %216 = vmatpush1.msra.mxu0 %v181
    %217 = vmatprep.subr.mxu0 0.0
    %218 = vmatpush1.msra.mxu0 %v180
    %219 = vmatprep.subr.mxu0 0.0
    %220 = vmatpush1.msra.mxu0 %v179
    %221 = vmatprep.subr.mxu0 0.0
    %222 = vmatpush1.msra.mxu0 %v178
    %223 = vmatprep.subr.mxu0 0.0
    %224 = vmatpush1.msra.mxu0 %v177
    %225 = vmatprep.subr.mxu0 0.0
    %226 = vmatpush2.msra.mxu0 0.0
    %227 = vmatprep.subr.mxu0 0.0
    %228 = vmatpush2.msra.mxu0 0.0
    %229 = vmatprep.subr.mxu0 0.0
    %230 = vmatpush2.msra.mxu0 0.0
    %231 = vmatprep.subr.mxu0 0.0
    %232 = vmatpush2.msra.mxu0 0.0
    %233 = vmatprep.subr.mxu0 0.0
    %234 = vmatpush2.msra.mxu0 0.0
    %235 = vmatprep.subr.mxu0 0.0
    %236 = vmatpush2.msra.mxu0 0.0
    %237 = vmatprep.subr.mxu0 0.0
    %238 = vmatpush2.msra.mxu0 0.0
    %239 = vmatprep.subr.mxu0 0.0
    %240 = vmatpush2.msra.mxu0 0.0
    %241 = vmatprep.subr.mxu0 0.0
    %242 = vmatpush2.msra.mxu0 0.0
    %243 = vmatprep.subr.mxu0 0.0
    %244 = vmatpush2.msra.mxu0 0.0
    %245 = vmatprep.subr.mxu0 0.0
    %246 = vmatpush2.msra.mxu0 0.0
    %247 = vmatprep.subr.mxu0 0.0
    %248 = vmatpush2.msra.mxu0 0.0
    %249 = vmatprep.subr.mxu0 0.0
    %250 = vmatpush2.msra.mxu0 0.0
    %251 = vmatprep.subr.mxu0 0.0
    %252 = vmatpush2.msra.mxu0 0.0
    %253 = vmatprep.subr.mxu0 0.0
    %254 = vmatpush2.msra.mxu0 0.0
    %255 = vmatprep.subr.mxu0 0.0
    %256 = vmatpush2.msra.mxu0 0.0
    %257 = vmatprep.mubr.f32.mxu0 0.0
    %258 = vmatmul.mubr.f32.gmra.mxu0 %v173
    %v259 = vpop.f32.mrf.mxu0
    %v260 = vadd.f32 0.0, %v259
    %v261 = vpop.f32.mrf.mxu0
    %262 = vmatprep.mubr.f32.mxu0 0.0
    %263 = vmatmul.mubr.f32.gmra.mxu0 %v174
    %v264 = vpop.f32.mrf.mxu0
    %v265 = vadd.f32 0.0, %v264
    %v266 = vpop.f32.mrf.mxu0
    %267 = vdwg.mxu0
    %v268 = vadd.f32 %v175, %v260
    %v269 = vadd.f32 %v176, %v265
    %270 = vst [vmem:[#allocation2] sm:$0xff] %v268
    %271 = vst [vmem:[#allocation2 + $0x8] sm:$0xff] %v269
    // Predicated region
    $region26: #{swiglu_padded.1} parent=1 // pred_check
      %p272 = pneg %p42
    $region27: #{swiglu_padded.1} parent=1 // pred_check_branch
      %274 = sbr.rel (%p272) target = $region29
    $region28: #{swiglu_padded.1} parent=1 // pred_region
      %v275 = vld [vmem:[#allocation2] sm:$0xff]
      %v276 = vld [vmem:[#allocation2 + $0x8] sm:$0xff]
      %277 = vst [vmem:[%s3] sm:$0xff] %v275
      %278 = vst [vmem:[%s3 + $0x8] sm:$0xff] %v276
    $region29: #{swiglu_padded.1} parent=1 // pred_fallthru
      _
    // Predicated region
    $region30: #{swiglu_padded.1} parent=1 // pred_check
      _
    $region31: #{swiglu_padded.1} parent=1 // pred_check_branch
      %280 = sbr.rel (0) target = $region33
    $region32: #{swiglu_padded.1} parent=1 // pred_region
      _
    $region33: #{swiglu_padded.1} parent=1 // pred_fallthru
      _
    // Predicated region
    $region34: #{swiglu_padded.1} parent=1 // pred_check
      _
    $region35: #{swiglu_padded.1} parent=1 // pred_check_branch
      %282 = sbr.rel (0) target = $region37
    $region36: #{swiglu_padded.1} parent=1 // pred_region
      _
    $region37: #{swiglu_padded.1} parent=1 // pred_fallthru
      _
    %283 = vsyncpa [#allocation4], 1
    %284 = vsyncpa [#allocation6], 1

</llo_original>
